<compile_context>
chip_gen: v5e
topology: v5e:2x2
jax: 0.10.0
libtpu: 0.0.40
codegen_flags: <defaults>
</compile_context>

<pallas_src>
import jax
import jax.numpy as jnp
from jax import lax
from jax.experimental import pallas as pl
from jax.experimental.pallas import tpu as pltpu


def _round_up(n, m):
    return ((n + m - 1) // m) * m


def _linear_kernel(x_ref, w_ref, b_ref, o_ref):
    # x_ref: (tb, D)        compute dtype (bf16 by default)
    # w_ref: (Cpad, D)      compute dtype, native (out_features, in_features)
    # b_ref: (1, Cpad)      float32
    # o_ref: (tb, Cpad)     float32
    acc = lax.dot_general(
        x_ref[...], w_ref[...],
        dimension_numbers=(((1,), (1,)), ((), ())),   # contract on D (trans_b)
        preferred_element_type=jnp.float32,           # f32 MXU accumulation
    )
    o_ref[...] = (acc + b_ref[...]).astype(o_ref.dtype)   # f32 epilogue


def linear_net_forward(x_nchw, weight, bias, *,
                       compute_dtype=jnp.bfloat16, tile_b=128):
    """LinearNet.forward.

    x_nchw : (B, C, H, W) float32  (any trailing shape; flattened to D)
    weight : (num_classes, input_size) float32  -- PyTorch nn.Linear layout
    bias   : (num_classes,) float32
    returns: (B, num_classes) float32
    """
    B = x_nchw.shape[0]
    x_flat = x_nchw.reshape(B, -1)                     # (B, D) -- glue reshape
    D = x_flat.shape[1]
    C = weight.shape[0]
    Cpad = max(128, _round_up(C, 128))                 # lane-dense output width

    # Zero-pad the class dim once (padded rows are zero -> sliced off below).
    w_pad = jnp.zeros((Cpad, D), dtype=compute_dtype)
    w_pad = w_pad.at[:C, :].set(weight.astype(compute_dtype))
    b_pad = jnp.zeros((1, Cpad), dtype=jnp.float32)
    b_pad = b_pad.at[0, :C].set(bias.astype(jnp.float32))

    x_c = x_flat.astype(compute_dtype)

    # Keep the double-buffered activation block well inside scoped VMEM.
    itemsize = jnp.dtype(compute_dtype).itemsize
    while tile_b > 8 and 2 * tile_b * D * itemsize > (8 << 20):
        tile_b //= 2

    if B <= tile_b:
        tb = B                       # single block == full array dims (legal)
    else:
        tb = tile_b                  # boundary block handled by Pallas
    grid_b = pl.cdiv(B, tb)

    cost = pl.CostEstimate(
        flops=2 * B * D * Cpad,
        transcendentals=0,
        bytes_accessed=B * D * itemsize + Cpad * D * itemsize
                       + B * Cpad * 4 + Cpad * 4,
    )

    y_pad = pl.pallas_call(
        _linear_kernel,
        out_shape=jax.ShapeDtypeStruct((B, Cpad), jnp.float32),
        grid=(grid_b,),
        in_specs=[
            pl.BlockSpec((tb, D), lambda i: (i, 0)),       # activation stream
            pl.BlockSpec((Cpad, D), lambda i: (0, 0)),     # weight: VMEM-resident
            pl.BlockSpec((1, Cpad), lambda i: (0, 0)),     # bias: VMEM-resident
        ],
        out_specs=pl.BlockSpec((tb, Cpad), lambda i: (i, 0)),
        compiler_params=pltpu.CompilerParams(
            dimension_semantics=("parallel",),             # 2nd TC on v7x
            vmem_limit_bytes=32 * 1024 * 1024,
        ),
        cost_estimate=cost,
    )(x_c, w_pad, b_pad)

    return y_pad[:, :C]                                    # drop padded lanes


if __name__ == "__main__":
    # Small CIFAR-like shapes: batch=2, channels=4, spatial=16x16, 10 classes.
    # At this toy size the kernel is pure fixed overhead; the tiling / bf16 /
    # lane-padding choices above matter once the batch grows.
    B, Cc, H, W = 2, 4, 16, 16
    num_classes = 10
    input_size = Cc * H * W  # 1024

    key = jax.random.PRNGKey(0)
    kx, kw, kb = jax.random.split(key, 3)

    x = jax.random.normal(kx, (B, Cc, H, W), dtype=jnp.float32)

    # Deterministic parameter init (matching nn.Linear's uniform bound).
    bound = 1.0 / jnp.sqrt(jnp.float32(input_size))
    weight = jax.random.uniform(kw, (num_classes, input_size),
                                dtype=jnp.float32, minval=-bound, maxval=bound)
    bias = jax.random.uniform(kb, (num_classes,),
                              dtype=jnp.float32, minval=-bound, maxval=bound)

    y = linear_net_forward(x, weight, bias)      # bf16 operands, f32 accum/out
    jax.block_until_ready(y)

    # Reference check against plain f32 JAX (loose tolerance for bf16 operands).
    y_ref = x.reshape(B, -1) @ weight.T + bias
    assert y.shape == (B, num_classes)
    assert y.dtype == jnp.float32
    assert jnp.allclose(y, y_ref, atol=3e-2, rtol=3e-2)

    print("KERNEL_OK")
</pallas_src>

<mosaic_0001>
module attributes {stable_mosaic.version = 11 : i64} {
  func.func @_linear_kernel(%arg0: i32, %arg1: memref<2x1024xbf16, #tpu.memory_space<vmem>>, %arg2: memref<128x1024xbf16, #tpu.memory_space<vmem>>, %arg3: memref<1x128xf32, #tpu.memory_space<vmem>>, %arg4: memref<2x128xf32, #tpu.memory_space<vmem>>) attributes {dimension_semantics = [#tpu.dimension_semantics<parallel>], iteration_bounds = array<i64: 1>, scalar_prefetch = 0 : i64, scratch_operands = 0 : i64, tpu.core_type = #tpu.core_type<tc>, window_params = [{transform_indices = @transform_0, window_bounds = array<i64: 2, 1024>}, {pipeline_mode = #tpu.pipeline_mode<synchronous>, transform_indices = @transform_1, window_bounds = array<i64: 128, 1024>}, {pipeline_mode = #tpu.pipeline_mode<synchronous>, transform_indices = @transform_2, window_bounds = array<i64: 1, 128>}, {transform_indices = @transform_3, window_bounds = array<i64: 2, 128>}]} {
    %c0 = arith.constant 0 : index
    %c0_0 = arith.constant 0 : index
    %0 = vector.load %arg1[%c0, %c0_0] : memref<2x1024xbf16, #tpu.memory_space<vmem>>, vector<2x1024xbf16>
    %c0_1 = arith.constant 0 : index
    %c0_2 = arith.constant 0 : index
    %1 = vector.load %arg2[%c0_1, %c0_2] : memref<128x1024xbf16, #tpu.memory_space<vmem>>, vector<128x1024xbf16>
    %cst = arith.constant dense<0.000000e+00> : vector<2x128xf32>
    %2 = tpu.matmul %0, %1, %cst {dimension_numbers = #tpu.dot_dimension_numbers<[1], [1], [0], [0], [0, 0, 1, 0], [], []>} : vector<2x1024xbf16>, vector<128x1024xbf16>, vector<2x128xf32> -> vector<2x128xf32>
    %c0_3 = arith.constant 0 : index
    %c0_4 = arith.constant 0 : index
    %3 = vector.load %arg3[%c0_3, %c0_4] : memref<1x128xf32, #tpu.memory_space<vmem>>, vector<1x128xf32>
    %4 = vector.broadcast %3 : vector<1x128xf32> to vector<2x128xf32>
    %5 = arith.addf %2, %4 : vector<2x128xf32>
    %c0_5 = arith.constant 0 : index
    %c0_6 = arith.constant 0 : index
    %6 = vector.load %arg4[%c0_5, %c0_6] : memref<2x128xf32, #tpu.memory_space<vmem>>, vector<2x128xf32>
    tpu.vector_store %arg4[%c0_5, %c0_6], %5 {strides = array<i32>} : memref<2x128xf32, #tpu.memory_space<vmem>>, vector<2x128xf32>,
    return
  }
  func.func @transform_0(%arg0: i32) -> (i32, i32) {
    %c0_i32 = arith.constant 0 : i32
    %c0_i32_0 = arith.constant 0 : i32
    return %arg0, %c0_i32 : i32, i32
  }
  func.func @transform_1(%arg0: i32) -> (i32, i32) {
    %c0_i32 = arith.constant 0 : i32
    %c0_i32_0 = arith.constant 0 : i32
    %c0_i32_1 = arith.constant 0 : i32
    return %c0_i32, %c0_i32_0 : i32, i32
  }
  func.func @transform_2(%arg0: i32) -> (i32, i32) {
    %c0_i32 = arith.constant 0 : i32
    %c0_i32_0 = arith.constant 0 : i32
    %c0_i32_1 = arith.constant 0 : i32
    return %c0_i32, %c0_i32_0 : i32, i32
  }
  func.func @transform_3(%arg0: i32) -> (i32, i32) {
    %c0_i32 = arith.constant 0 : i32
    %c0_i32_0 = arith.constant 0 : i32
    return %arg0, %c0_i32 : i32, i32
  }
}

</mosaic_0001>

<llo_original>
// kernel: tpu_custom_call.1
$region0: #{tpu_custom_call.1}
  #allocation0 [shape = 'u32[]', space=smem, size = 0x4, offset = 0x4, fixed_abs, tag = 'smem constant byte address 0x4 - core index']
  #allocation1 [shape = 'u32[72,128]{1,0:T(1,128)}', space=vmem, size = 0x9000, scoped, tag = 'internal scratch']
  %s0 = inlined_call_operand.hbm [shape: bf16[2,1024], index: 0, kind: input, shape index: {}]
  %s1 = inlined_call_operand.hbm [shape: bf16[128,1024], index: 1, kind: input, shape index: {}]
  %s2 = inlined_call_operand.vmem [shape: f32[1,128], index: 2, kind: input, shape index: {}]
  %s3 = inlined_call_operand.hbm [shape: f32[2,128], index: 3, kind: output, shape index: {}]
  %s4 = sld [smem:[#allocation0]]
  $region30: #{tpu_custom_call.1} parent=0
    _
  %s6 = ssub.s32 1, %s4
  %s7 = scalar_select 0, %s6, %s4
  $region1: #{tpu_custom_call.1} parent=0
    #allocation2 [shape = 'u8[4096]{0}', space=vmem, size = 0x1000, scoped, tag = 'input window, operand 0, single buffered']
    #allocation3 [shape = 's32[1]{0}', space=sflag, size = 0x4, scoped, tag = 'scoped memory for tpu_custom_call.1']
    #allocation4 [shape = 's32[1]{0}', space=sflag, size = 0x4, scoped, tag = 'scoped memory for tpu_custom_call.1']
    #allocation5 [shape = 'u8[262144]{0}', space=vmem, size = 0x40000, scoped, tag = 'input window, operand 1, single buffered']
    #allocation6 [shape = 's32[1]{0}', space=sflag, size = 0x4, scoped, tag = 'scoped memory for tpu_custom_call.1']
    #allocation7 [shape = 'u8[1024]{0}', space=vmem, size = 0x400, scoped, tag = 'output window, operand 0, single buffered']
    %8 = vsyncpa [#allocation3], 0
    %9 = vsyncpa [#allocation6], 0
    %10 = vsyncpa [#allocation4], 0
    // Predicated region
    $region2: #{tpu_custom_call.1} parent=1 // pred_check
      _
    $region3: #{tpu_custom_call.1} parent=1 // pred_check_branch
      %12 = sbr.rel (0) target = $region5
    $region4: #{tpu_custom_call.1} parent=1 // pred_region
      %14 = vsyncadd [#allocation3], 0
      %s16 = sshll.u32 %s0, 4
      %s17 = int_to_ptr.hbm [resolvable:$true] %s16
      %s18 = sshll.u32 [#allocation2], 4
      %s19 = int_to_ptr.vmem [resolvable:$true] %s18
      %21 = dma.hbm_to_vmem [thread:$0]  %s17, 128, %s19, [#allocation3]
    $region5: #{tpu_custom_call.1} parent=1 // pred_fallthru
      _
    // Predicated region
    $region6: #{tpu_custom_call.1} parent=1 // pred_check
      _
    $region7: #{tpu_custom_call.1} parent=1 // pred_check_branch
      %23 = sbr.rel (0) target = $region9
    $region8: #{tpu_custom_call.1} parent=1 // pred_region
      %25 = vsyncadd [#allocation6], 0
      %s26 = sshll.u32 %s1, 4
      %s27 = int_to_ptr.hbm [resolvable:$true] %s26
      %s28 = sshll.u32 [#allocation5], 4
      %s29 = int_to_ptr.vmem [resolvable:$true] %s28
      %34 = dma.hbm_to_vmem [thread:$0]  %s27, 8192, %s29, [#allocation6], 512, 512, 32
    $region9: #{tpu_custom_call.1} parent=1 // pred_fallthru
      _
    // Predicated region
    $region10: #{tpu_custom_call.1} parent=1 // pred_check
      _
    $region11: #{tpu_custom_call.1} parent=1 // pred_check_branch
      %36 = sbr.rel (0) target = $region13
    $region12: #{tpu_custom_call.1} parent=1 // pred_region
      _
    $region13: #{tpu_custom_call.1} parent=1 // pred_fallthru
      _
    // Predicated region
    $region14: #{tpu_custom_call.1} parent=1 // pred_check
      _
    $region15: #{tpu_custom_call.1} parent=1 // pred_check_branch
      %38 = sbr.rel (0) target = $region17
    $region16: #{tpu_custom_call.1} parent=1 // pred_region
      %40 = dma.done [#allocation3], 128
    $region17: #{tpu_custom_call.1} parent=1 // pred_fallthru
      _
    // Predicated region
    $region18: #{tpu_custom_call.1} parent=1 // pred_check
      _
    $region19: #{tpu_custom_call.1} parent=1 // pred_check_branch
      %42 = sbr.rel (0) target = $region21
    $region20: #{tpu_custom_call.1} parent=1 // pred_region
      %44 = dma.done [#allocation6], 8192
    $region21: #{tpu_custom_call.1} parent=1 // pred_fallthru
      _
    %v45 = vld [vmem:[#allocation2] sm:$0xff]
    %v46 = vld [vmem:[#allocation5] sm:$0xff]
    %v47 = vld [vmem:[#allocation5 + $0x8] sm:$0xff]
    %v48 = vld [vmem:[#allocation5 + $0x10] sm:$0xff]
    %v49 = vld [vmem:[#allocation5 + $0x18] sm:$0xff]
    %v50 = vld [vmem:[#allocation5 + $0x20] sm:$0xff]
    %v51 = vld [vmem:[#allocation5 + $0x28] sm:$0xff]
    %v52 = vld [vmem:[#allocation5 + $0x30] sm:$0xff]
    %v53 = vld [vmem:[#allocation5 + $0x38] sm:$0xff]
    %v54 = vld [vmem:[#allocation5 + $0x40] sm:$0xff]
    %v55 = vld [vmem:[#allocation5 + $0x48] sm:$0xff]
    %v56 = vld [vmem:[#allocation5 + $0x50] sm:$0xff]
    %v57 = vld [vmem:[#allocation5 + $0x58] sm:$0xff]
    %v58 = vld [vmem:[#allocation5 + $0x60] sm:$0xff]
    %v59 = vld [vmem:[#allocation5 + $0x68] sm:$0xff]
    %v60 = vld [vmem:[#allocation5 + $0x70] sm:$0xff]
    %v61 = vld [vmem:[#allocation5 + $0x78] sm:$0xff]
    %v62 = vld [vmem:[#allocation5 + $0x80] sm:$0xff]
    %v63 = vld [vmem:[#allocation5 + $0x88] sm:$0xff]
    %v64 = vld [vmem:[#allocation5 + $0x90] sm:$0xff]
    %v65 = vld [vmem:[#allocation5 + $0x98] sm:$0xff]
    %v66 = vld [vmem:[#allocation5 + $0xa0] sm:$0xff]
    %v67 = vld [vmem:[#allocation5 + $0xa8] sm:$0xff]
    %v68 = vld [vmem:[#allocation5 + $0xb0] sm:$0xff]
    %v69 = vld [vmem:[#allocation5 + $0xb8] sm:$0xff]
    %v70 = vld [vmem:[#allocation5 + $0xc0] sm:$0xff]
    %v71 = vld [vmem:[#allocation5 + $0xc8] sm:$0xff]
    %v72 = vld [vmem:[#allocation5 + $0xd0] sm:$0xff]
    %v73 = vld [vmem:[#allocation5 + $0xd8] sm:$0xff]
    %v74 = vld [vmem:[#allocation5 + $0xe0] sm:$0xff]
    %v75 = vld [vmem:[#allocation5 + $0xe8] sm:$0xff]
    %v76 = vld [vmem:[#allocation5 + $0xf0] sm:$0xff]
    %v77 = vld [vmem:[#allocation5 + $0xf8] sm:$0xff]
    %v78 = vld [vmem:[#allocation5 + $0x100] sm:$0xff]
    %v79 = vld [vmem:[#allocation5 + $0x108] sm:$0xff]
    %v80 = vld [vmem:[#allocation5 + $0x110] sm:$0xff]
    %v81 = vld [vmem:[#allocation5 + $0x118] sm:$0xff]
    %v82 = vld [vmem:[#allocation5 + $0x120] sm:$0xff]
    %v83 = vld [vmem:[#allocation5 + $0x128] sm:$0xff]
    %v84 = vld [vmem:[#allocation5 + $0x130] sm:$0xff]
    %v85 = vld [vmem:[#allocation5 + $0x138] sm:$0xff]
    %v86 = vld [vmem:[#allocation5 + $0x140] sm:$0xff]
    %v87 = vld [vmem:[#allocation5 + $0x148] sm:$0xff]
    %v88 = vld [vmem:[#allocation5 + $0x150] sm:$0xff]
    %v89 = vld [vmem:[#allocation5 + $0x158] sm:$0xff]
    %v90 = vld [vmem:[#allocation5 + $0x160] sm:$0xff]
    %v91 = vld [vmem:[#allocation5 + $0x168] sm:$0xff]
    %v92 = vld [vmem:[#allocation5 + $0x170] sm:$0xff]
    %v93 = vld [vmem:[#allocation5 + $0x178] sm:$0xff]
    %v94 = vld [vmem:[#allocation5 + $0x180] sm:$0xff]
    %v95 = vld [vmem:[#allocation5 + $0x188] sm:$0xff]
    %v96 = vld [vmem:[#allocation5 + $0x190] sm:$0xff]
    %v97 = vld [vmem:[#allocation5 + $0x198] sm:$0xff]
    %v98 = vld [vmem:[#allocation5 + $0x1a0] sm:$0xff]
    %v99 = vld [vmem:[#allocation5 + $0x1a8] sm:$0xff]
    %v100 = vld [vmem:[#allocation5 + $0x1b0] sm:$0xff]
    %v101 = vld [vmem:[#allocation5 + $0x1b8] sm:$0xff]
    %v102 = vld [vmem:[#allocation5 + $0x1c0] sm:$0xff]
    %v103 = vld [vmem:[#allocation5 + $0x1c8] sm:$0xff]
    %v104 = vld [vmem:[#allocation5 + $0x1d0] sm:$0xff]
    %v105 = vld [vmem:[#allocation5 + $0x1d8] sm:$0xff]
    %v106 = vld [vmem:[#allocation5 + $0x1e0] sm:$0xff]
    %v107 = vld [vmem:[#allocation5 + $0x1e8] sm:$0xff]
    %v108 = vld [vmem:[#allocation5 + $0x1f0] sm:$0xff]
    %v109 = vld [vmem:[#allocation5 + $0x1f8] sm:$0xff]
    %v110 = vld [vmem:[%s2] sm:$0x1]
    %v112 = vperm.slane %v110, 0
    %115 = vst [vmem:[#allocation1] ss:$9 sm:$0xff] %v45
    %v116 = vld [vmem:[#allocation1] sm:$0xff]
    %v117 = vld [vmem:[#allocation1 + $0x9] sm:$0xff]
    %v118 = vld [vmem:[#allocation1 + $0x12] sm:$0xff]
    %v119 = vld [vmem:[#allocation1 + $0x1b] sm:$0xff]
    %v120 = vld [vmem:[#allocation1 + $0x24] sm:$0xff]
    %v121 = vld [vmem:[#allocation1 + $0x2d] sm:$0xff]
    %v122 = vld [vmem:[#allocation1 + $0x36] sm:$0xff]
    %v123 = vld [vmem:[#allocation1 + $0x3f] sm:$0xff]
    %v196 = vunpack.c.l.b16 %v46
    %v197 = vunpack.c.h.b16 %v46
    %v198 = vunpack.c.l.b16 %v47
    %v199 = vunpack.c.h.b16 %v47
    %v200 = vunpack.c.l.b16 %v48
    %v201 = vunpack.c.h.b16 %v48
    %v202 = vunpack.c.l.b16 %v49
    %v203 = vunpack.c.h.b16 %v49
    %v204 = vunpack.c.l.b16 %v50
    %v205 = vunpack.c.h.b16 %v50
    %v206 = vunpack.c.l.b16 %v51
    %v207 = vunpack.c.h.b16 %v51
    %v208 = vunpack.c.l.b16 %v52
    %v209 = vunpack.c.h.b16 %v52
    %v210 = vunpack.c.l.b16 %v53
    %v211 = vunpack.c.h.b16 %v53
    %v212 = vunpack.c.l.b16 %v54
    %v213 = vunpack.c.h.b16 %v54
    %v214 = vunpack.c.l.b16 %v55
    %v215 = vunpack.c.h.b16 %v55
    %v216 = vunpack.c.l.b16 %v56
    %v217 = vunpack.c.h.b16 %v56
    %v218 = vunpack.c.l.b16 %v57
    %v219 = vunpack.c.h.b16 %v57
    %v220 = vunpack.c.l.b16 %v58
    %v221 = vunpack.c.h.b16 %v58
    %v222 = vunpack.c.l.b16 %v59
    %v223 = vunpack.c.h.b16 %v59
    %v224 = vunpack.c.l.b16 %v60
    %v225 = vunpack.c.h.b16 %v60
    %v226 = vunpack.c.l.b16 %v61
    %v227 = vunpack.c.h.b16 %v61
    %v228 = vunpack.c.l.b16 %v62
    %v229 = vunpack.c.h.b16 %v62
    %v230 = vunpack.c.l.b16 %v63
    %v231 = vunpack.c.h.b16 %v63
    %v232 = vunpack.c.l.b16 %v64
    %v233 = vunpack.c.h.b16 %v64
    %v234 = vunpack.c.l.b16 %v65
    %v235 = vunpack.c.h.b16 %v65
    %v236 = vunpack.c.l.b16 %v66
    %v237 = vunpack.c.h.b16 %v66
    %v238 = vunpack.c.l.b16 %v67
    %v239 = vunpack.c.h.b16 %v67
    %v240 = vunpack.c.l.b16 %v68
    %v241 = vunpack.c.h.b16 %v68
    %v242 = vunpack.c.l.b16 %v69
    %v243 = vunpack.c.h.b16 %v69
    %v244 = vunpack.c.l.b16 %v70
    %v245 = vunpack.c.h.b16 %v70
    %v246 = vunpack.c.l.b16 %v71
    %v247 = vunpack.c.h.b16 %v71
    %v248 = vunpack.c.l.b16 %v72
    %v249 = vunpack.c.h.b16 %v72
    %v250 = vunpack.c.l.b16 %v73
    %v251 = vunpack.c.h.b16 %v73
    %v252 = vunpack.c.l.b16 %v74
    %v253 = vunpack.c.h.b16 %v74
    %v254 = vunpack.c.l.b16 %v75
    %v255 = vunpack.c.h.b16 %v75
    %v256 = vunpack.c.l.b16 %v76
    %v257 = vunpack.c.h.b16 %v76
    %v258 = vunpack.c.l.b16 %v77
    %v259 = vunpack.c.h.b16 %v77
    %v260 = vunpack.c.l.b16 %v78
    %v261 = vunpack.c.h.b16 %v78
    %v262 = vunpack.c.l.b16 %v79
    %v263 = vunpack.c.h.b16 %v79
    %v264 = vunpack.c.l.b16 %v80
    %v265 = vunpack.c.h.b16 %v80
    %v266 = vunpack.c.l.b16 %v81
    %v267 = vunpack.c.h.b16 %v81
    %v268 = vunpack.c.l.b16 %v82
    %v269 = vunpack.c.h.b16 %v82
    %v270 = vunpack.c.l.b16 %v83
    %v271 = vunpack.c.h.b16 %v83
    %v272 = vunpack.c.l.b16 %v84
    %v273 = vunpack.c.h.b16 %v84
    %v274 = vunpack.c.l.b16 %v85
    %v275 = vunpack.c.h.b16 %v85
    %v276 = vunpack.c.l.b16 %v86
    %v277 = vunpack.c.h.b16 %v86
    %v278 = vunpack.c.l.b16 %v87
    %v279 = vunpack.c.h.b16 %v87
    %v280 = vunpack.c.l.b16 %v88
    %v281 = vunpack.c.h.b16 %v88
    %v282 = vunpack.c.l.b16 %v89
    %v283 = vunpack.c.h.b16 %v89
    %v284 = vunpack.c.l.b16 %v90
    %v285 = vunpack.c.h.b16 %v90
    %v286 = vunpack.c.l.b16 %v91
    %v287 = vunpack.c.h.b16 %v91
    %v288 = vunpack.c.l.b16 %v92
    %v289 = vunpack.c.h.b16 %v92
    %v290 = vunpack.c.l.b16 %v93
    %v291 = vunpack.c.h.b16 %v93
    %v292 = vunpack.c.l.b16 %v94
    %v293 = vunpack.c.h.b16 %v94
    %v294 = vunpack.c.l.b16 %v95
    %v295 = vunpack.c.h.b16 %v95
    %v296 = vunpack.c.l.b16 %v96
    %v297 = vunpack.c.h.b16 %v96
    %v298 = vunpack.c.l.b16 %v97
    %v299 = vunpack.c.h.b16 %v97
    %v300 = vunpack.c.l.b16 %v98
    %v301 = vunpack.c.h.b16 %v98
    %v302 = vunpack.c.l.b16 %v99
    %v303 = vunpack.c.h.b16 %v99
    %v304 = vunpack.c.l.b16 %v100
    %v305 = vunpack.c.h.b16 %v100
    %v306 = vunpack.c.l.b16 %v101
    %v307 = vunpack.c.h.b16 %v101
    %v308 = vunpack.c.l.b16 %v102
    %v309 = vunpack.c.h.b16 %v102
    %v310 = vunpack.c.l.b16 %v103
    %v311 = vunpack.c.h.b16 %v103
    %v312 = vunpack.c.l.b16 %v104
    %v313 = vunpack.c.h.b16 %v104
    %v314 = vunpack.c.l.b16 %v105
    %v315 = vunpack.c.h.b16 %v105
    %v316 = vunpack.c.l.b16 %v106
    %v317 = vunpack.c.h.b16 %v106
    %v318 = vunpack.c.l.b16 %v107
    %v319 = vunpack.c.h.b16 %v107
    %v320 = vunpack.c.l.b16 %v108
    %v321 = vunpack.c.h.b16 %v108
    %v322 = vunpack.c.l.b16 %v109
    %v323 = vunpack.c.h.b16 %v109
    %v324 = vpack.c.b16 %v204, %v196
    %v325 = vpack.c.b16 %v205, %v197
    %v326 = vpack.c.b16 %v206, %v198
    %v327 = vpack.c.b16 %v207, %v199
    %v328 = vpack.c.b16 %v208, %v200
    %v329 = vpack.c.b16 %v209, %v201
    %v330 = vpack.c.b16 %v210, %v202
    %v331 = vpack.c.b16 %v211, %v203
    %v332 = vpack.c.b16 %v220, %v212
    %v333 = vpack.c.b16 %v221, %v213
    %v334 = vpack.c.b16 %v222, %v214
    %v335 = vpack.c.b16 %v223, %v215
    %v336 = vpack.c.b16 %v224, %v216
    %v337 = vpack.c.b16 %v225, %v217
    %v338 = vpack.c.b16 %v226, %v218
    %v339 = vpack.c.b16 %v227, %v219
    %v340 = vpack.c.b16 %v236, %v228
    %v341 = vpack.c.b16 %v237, %v229
    %v342 = vpack.c.b16 %v238, %v230
    %v343 = vpack.c.b16 %v239, %v231
    %v344 = vpack.c.b16 %v240, %v232
    %v345 = vpack.c.b16 %v241, %v233
    %v346 = vpack.c.b16 %v242, %v234
    %v347 = vpack.c.b16 %v243, %v235
    %v348 = vpack.c.b16 %v252, %v244
    %v349 = vpack.c.b16 %v253, %v245
    %v350 = vpack.c.b16 %v254, %v246
    %v351 = vpack.c.b16 %v255, %v247
    %v352 = vpack.c.b16 %v256, %v248
    %v353 = vpack.c.b16 %v257, %v249
    %v354 = vpack.c.b16 %v258, %v250
    %v355 = vpack.c.b16 %v259, %v251
    %v356 = vpack.c.b16 %v268, %v260
    %v357 = vpack.c.b16 %v269, %v261
    %v358 = vpack.c.b16 %v270, %v262
    %v359 = vpack.c.b16 %v271, %v263
    %v360 = vpack.c.b16 %v272, %v264
    %v361 = vpack.c.b16 %v273, %v265
    %v362 = vpack.c.b16 %v274, %v266
    %v363 = vpack.c.b16 %v275, %v267
    %v364 = vpack.c.b16 %v284, %v276
    %v365 = vpack.c.b16 %v285, %v277
    %v366 = vpack.c.b16 %v286, %v278
    %v367 = vpack.c.b16 %v287, %v279
    %v368 = vpack.c.b16 %v288, %v280
    %v369 = vpack.c.b16 %v289, %v281
    %v370 = vpack.c.b16 %v290, %v282
    %v371 = vpack.c.b16 %v291, %v283
    %v372 = vpack.c.b16 %v300, %v292
    %v373 = vpack.c.b16 %v301, %v293
    %v374 = vpack.c.b16 %v302, %v294
    %v375 = vpack.c.b16 %v303, %v295
    %v376 = vpack.c.b16 %v304, %v296
    %v377 = vpack.c.b16 %v305, %v297
    %v378 = vpack.c.b16 %v306, %v298
    %v379 = vpack.c.b16 %v307, %v299
    %v380 = vpack.c.b16 %v316, %v308
    %v381 = vpack.c.b16 %v317, %v309
    %v382 = vpack.c.b16 %v318, %v310
    %v383 = vpack.c.b16 %v319, %v311
    %v384 = vpack.c.b16 %v320, %v312
    %v385 = vpack.c.b16 %v321, %v313
    %v386 = vpack.c.b16 %v322, %v314
    %v387 = vpack.c.b16 %v323, %v315
    %452 = vmatpush.bf16.xpose.msra.mxu0 %v380
    %453 = vmatpush.bf16.xpose.msra.mxu0 %v372
    %454 = vmatpush.bf16.xpose.msra.mxu0 %v364
    %455 = vmatpush.bf16.xpose.msra.mxu0 %v356
    %456 = vmatpush.bf16.xpose.msra.mxu0 %v348
    %457 = vmatpush.bf16.xpose.msra.mxu0 %v340
    %458 = vmatpush.bf16.xpose.msra.mxu0 %v332
    %459 = vmatpush.bf16.xpose.msra.mxu0 %v324
    %460 = vmatmul.bf16.gmra.mxu0 %v116
    %v461 = vpop.f32.mrf.mxu0
    %v462 = vadd.f32 %v112, %v461
    %v463 = vpop.f32.mrf.mxu0
    %464 = vdwg.mxu0
    %465 = vmatpush.bf16.xpose.msra.mxu0 %v381
    %466 = vmatpush.bf16.xpose.msra.mxu0 %v373
    %467 = vmatpush.bf16.xpose.msra.mxu0 %v365
    %468 = vmatpush.bf16.xpose.msra.mxu0 %v357
    %469 = vmatpush.bf16.xpose.msra.mxu0 %v349
    %470 = vmatpush.bf16.xpose.msra.mxu0 %v341
    %471 = vmatpush.bf16.xpose.msra.mxu0 %v333
    %472 = vmatpush.bf16.xpose.msra.mxu0 %v325
    %473 = vmatmul.bf16.gmra.mxu0 %v117
    %v474 = vpop.f32.mrf.mxu0
    %v475 = vadd.f32 %v462, %v474
    %v476 = vpop.f32.mrf.mxu0
    %477 = vdwg.mxu0
    %478 = vmatpush.bf16.xpose.msra.mxu0 %v382
    %479 = vmatpush.bf16.xpose.msra.mxu0 %v374
    %480 = vmatpush.bf16.xpose.msra.mxu0 %v366
    %481 = vmatpush.bf16.xpose.msra.mxu0 %v358
    %482 = vmatpush.bf16.xpose.msra.mxu0 %v350
    %483 = vmatpush.bf16.xpose.msra.mxu0 %v342
    %484 = vmatpush.bf16.xpose.msra.mxu0 %v334
    %485 = vmatpush.bf16.xpose.msra.mxu0 %v326
    %486 = vmatmul.bf16.gmra.mxu0 %v118
    %v487 = vpop.f32.mrf.mxu0
    %v488 = vadd.f32 %v475, %v487
    %v489 = vpop.f32.mrf.mxu0
    %490 = vdwg.mxu0
    %491 = vmatpush.bf16.xpose.msra.mxu0 %v383
    %492 = vmatpush.bf16.xpose.msra.mxu0 %v375
    %493 = vmatpush.bf16.xpose.msra.mxu0 %v367
    %494 = vmatpush.bf16.xpose.msra.mxu0 %v359
    %495 = vmatpush.bf16.xpose.msra.mxu0 %v351
    %496 = vmatpush.bf16.xpose.msra.mxu0 %v343
    %497 = vmatpush.bf16.xpose.msra.mxu0 %v335
    %498 = vmatpush.bf16.xpose.msra.mxu0 %v327
    %499 = vmatmul.bf16.gmra.mxu0 %v119
    %v500 = vpop.f32.mrf.mxu0
    %v501 = vadd.f32 %v488, %v500
    %v502 = vpop.f32.mrf.mxu0
    %503 = vdwg.mxu0
    %504 = vmatpush.bf16.xpose.msra.mxu0 %v384
    %505 = vmatpush.bf16.xpose.msra.mxu0 %v376
    %506 = vmatpush.bf16.xpose.msra.mxu0 %v368
    %507 = vmatpush.bf16.xpose.msra.mxu0 %v360
    %508 = vmatpush.bf16.xpose.msra.mxu0 %v352
    %509 = vmatpush.bf16.xpose.msra.mxu0 %v344
    %510 = vmatpush.bf16.xpose.msra.mxu0 %v336
    %511 = vmatpush.bf16.xpose.msra.mxu0 %v328
    %512 = vmatmul.bf16.gmra.mxu0 %v120
    %v513 = vpop.f32.mrf.mxu0
    %v514 = vadd.f32 %v501, %v513
    %v515 = vpop.f32.mrf.mxu0
    %516 = vdwg.mxu0
    %517 = vmatpush.bf16.xpose.msra.mxu0 %v385
    %518 = vmatpush.bf16.xpose.msra.mxu0 %v377
    %519 = vmatpush.bf16.xpose.msra.mxu0 %v369
    %520 = vmatpush.bf16.xpose.msra.mxu0 %v361
    %521 = vmatpush.bf16.xpose.msra.mxu0 %v353
    %522 = vmatpush.bf16.xpose.msra.mxu0 %v345
    %523 = vmatpush.bf16.xpose.msra.mxu0 %v337
    %524 = vmatpush.bf16.xpose.msra.mxu0 %v329
    %525 = vmatmul.bf16.gmra.mxu0 %v121
    %v526 = vpop.f32.mrf.mxu0
    %v527 = vadd.f32 %v514, %v526
    %v528 = vpop.f32.mrf.mxu0
    %529 = vdwg.mxu0
    %530 = vmatpush.bf16.xpose.msra.mxu0 %v386
    %531 = vmatpush.bf16.xpose.msra.mxu0 %v378
    %532 = vmatpush.bf16.xpose.msra.mxu0 %v370
    %533 = vmatpush.bf16.xpose.msra.mxu0 %v362
    %534 = vmatpush.bf16.xpose.msra.mxu0 %v354
    %535 = vmatpush.bf16.xpose.msra.mxu0 %v346
    %536 = vmatpush.bf16.xpose.msra.mxu0 %v338
    %537 = vmatpush.bf16.xpose.msra.mxu0 %v330
    %538 = vmatmul.bf16.gmra.mxu0 %v122
    %v539 = vpop.f32.mrf.mxu0
    %v540 = vadd.f32 %v527, %v539
    %v541 = vpop.f32.mrf.mxu0
    %542 = vdwg.mxu0
    %543 = vmatpush.bf16.xpose.msra.mxu0 %v387
    %544 = vmatpush.bf16.xpose.msra.mxu0 %v379
    %545 = vmatpush.bf16.xpose.msra.mxu0 %v371
    %546 = vmatpush.bf16.xpose.msra.mxu0 %v363
    %547 = vmatpush.bf16.xpose.msra.mxu0 %v355
    %548 = vmatpush.bf16.xpose.msra.mxu0 %v347
    %549 = vmatpush.bf16.xpose.msra.mxu0 %v339
    %550 = vmatpush.bf16.xpose.msra.mxu0 %v331
    %551 = vmatmul.bf16.gmra.mxu0 %v123
    %v552 = vpop.f32.mrf.mxu0
    %v553 = vadd.f32 %v540, %v552
    %v554 = vpop.f32.mrf.mxu0
    %555 = vdwg.mxu0
    %556 = vst [vmem:[#allocation7] sm:$0x3] %v553
    // Predicated region
    $region22: #{tpu_custom_call.1} parent=1 // pred_check
      _
    $region23: #{tpu_custom_call.1} parent=1 // pred_check_branch
      %558 = sbr.rel (0) target = $region25
    $region24: #{tpu_custom_call.1} parent=1 // pred_region
      %560 = vsyncadd [#allocation4], 0
      %s562 = sshll.u32 [#allocation7], 4
      %s563 = int_to_ptr.vmem [resolvable:$true] %s562
      %s564 = sshll.u32 %s3, 4
      %s565 = int_to_ptr.hbm [resolvable:$true] %s564
      %567 = dma.vmem_to_hbm [thread:$0]  %s563, 32, %s565, [#allocation4]
    $region25: #{tpu_custom_call.1} parent=1 // pred_fallthru
      _
    // Predicated region
    $region26: #{tpu_custom_call.1} parent=1 // pred_check
      _
    $region27: #{tpu_custom_call.1} parent=1 // pred_check_branch
      %569 = sbr.rel (0) target = $region29
    $region28: #{tpu_custom_call.1} parent=1 // pred_region
      %571 = dma.done [#allocation4], 32
    $region29: #{tpu_custom_call.1} parent=1 // pred_fallthru
      _
    %572 = vsyncpa [#allocation3], 1
    %573 = vsyncpa [#allocation6], 1
    %574 = vsyncpa [#allocation4], 1

</llo_original>
